<compile_context>
chip_gen: v7x
topology: tpu7x:2x2x1
jax: 0.10.0
libtpu: 0.0.40
codegen_flags: <defaults>
</compile_context>

<pallas_src>
import functools

import jax
import jax.numpy as jnp
from jax.experimental import pallas as pl
from jax.experimental.pallas import tpu as pltpu


def _round_up(x, m):
    return (x + m - 1) // m * m


def _tile_and_pad(dim, max_tile, align):
    """Balanced tile size (multiple of `align`) and padded extent.

    Avoids round_up(dim, max_tile) padding waste for awkward dims: e.g.
    dim=1200, max_tile=512 -> 3 tiles of 400 (no padding) instead of padding
    to 1536.
    """
    dim_p = _round_up(dim, align)
    if dim_p <= max_tile:
        return dim_p, dim_p
    num = -(-dim_p // max_tile)                  # cdiv
    tile = _round_up(-(-dim_p // num), align)
    return tile, tile * num


def _pad2(a, rows, cols):
    """Zero-pad a 2-D array only if needed (no-op -> no extra HBM pass)."""
    r, c = a.shape
    if rows == r and cols == c:
        return a
    return jnp.pad(a, ((0, rows - r), (0, cols - c)))


@functools.lru_cache(maxsize=None)
def _vmem_limit_bytes():
    """~3/4 of physical VMEM (96 MiB cap): lets v5e/v6e (128 MiB) take big
    tiles without exceeding v7x's 64 MiB. Falls back to the compiler default."""
    try:
        cap = int(pltpu.get_tpu_info().vmem_capacity_bytes)
    except Exception:
        return None
    return int(min(cap * 3 // 4, 96 * 1024 * 1024))


def _gcn_fused_kernel(adj_ref, x_ref, w_ref, *refs, compute_dtype, has_bias):
    """One (i, j, k) grid step of out = adj @ (x @ W) (+ bias).

    adj/x tiles arrive in their HBM dtype and are cast to `compute_dtype`
    here (hides under DMA). Accumulation is f32 in a VMEM scratch that stays
    resident across the trailing 'arbitrary' node-reduction axis k; bias is
    added only in the last-k epilogue.
    """
    if has_bias:
        bias_ref, o_ref, acc_ref = refs
    else:
        o_ref, acc_ref = refs

    k = pl.program_id(2)

    @pl.when(k == 0)
    def _():
        acc_ref[...] = jnp.zeros_like(acc_ref)

    # Feature transform for this node tile: (tk, dp) @ (dp, tn) -> f32.
    support = jnp.dot(x_ref[...].astype(compute_dtype), w_ref[...],
                      preferred_element_type=jnp.float32)
    # Aggregation: (tm, tk) @ (tk, tn), accumulated in f32 across k.
    acc_ref[...] += jnp.dot(adj_ref[...].astype(compute_dtype),
                            support.astype(compute_dtype),
                            preferred_element_type=jnp.float32)

    @pl.when(k == pl.num_programs(2) - 1)
    def _():
        out = acc_ref[...]
        if has_bias:
            out = out + bias_ref[...]          # f32 bias, broadcast over rows
        o_ref[...] = out.astype(o_ref.dtype)


def gcn_layer(x, adj, weight, bias=None, *, compute_dtype=jnp.bfloat16,
              out_dtype=jnp.float32, tm_max=512, tn_max=512, tk_max=1024):
    """Fused Pallas GCN layer forward: adj @ (x @ weight) (+ bias)."""
    n_nodes, in_dim = x.shape
    assert adj.shape == (n_nodes, n_nodes), adj.shape
    assert weight.shape[0] == in_dim, (x.shape, weight.shape)
    out_dim = weight.shape[1]
    has_bias = bias is not None

    dp = _round_up(in_dim, 128)                       # padded feature width
    # Keep the (tk, dp) x block within ~8 MiB single-buffered so very wide
    # feature dims cannot blow VMEM.
    x_itemsize = jnp.dtype(x.dtype).itemsize
    tk_budget = max(128, ((8 << 20) // max(1, dp * x_itemsize)) // 128 * 128)

    tm, mp = _tile_and_pad(n_nodes, tm_max, 8)                     # adj/out rows
    tk, kp = _tile_and_pad(n_nodes, min(tk_max, tk_budget), 128)   # node reduction
    tn, np_ = _tile_and_pad(out_dim, tn_max, 128)                  # lane-dense out

    adj_p = _pad2(adj, mp, kp)                        # no-op when tile-multiple
    x_p = _pad2(x, kp, dp)
    w_p = _pad2(weight.astype(compute_dtype), dp, np_)

    in_specs = [
        pl.BlockSpec((tm, tk), lambda i, j, k: (i, k)),   # adj tile
        pl.BlockSpec((tk, dp), lambda i, j, k: (k, 0)),   # x node tile (full feat width)
        pl.BlockSpec((dp, tn), lambda i, j, k: (0, j)),   # W col tile (resident per j)
    ]
    args = [adj_p, x_p, w_p]
    if has_bias:
        bias_p = _pad2(bias.astype(jnp.float32).reshape(1, out_dim), 1, np_)
        in_specs.append(pl.BlockSpec((1, tn), lambda i, j, k: (0, j)))
        args.append(bias_p)

    grid = (mp // tm, np_ // tn, kp // tk)

    out_p = pl.pallas_call(
        functools.partial(_gcn_fused_kernel, compute_dtype=compute_dtype,
                          has_bias=has_bias),
        out_shape=jax.ShapeDtypeStruct((mp, np_), out_dtype),
        grid_spec=pltpu.PrefetchScalarGridSpec(
            num_scalar_prefetch=0,
            grid=grid,
            in_specs=in_specs,
            out_specs=pl.BlockSpec((tm, tn), lambda i, j, k: (i, j)),
            scratch_shapes=[pltpu.VMEM((tm, tn), jnp.float32)],
        ),
        compiler_params=pltpu.CompilerParams(
            dimension_semantics=("parallel", "parallel", "arbitrary"),
            vmem_limit_bytes=_vmem_limit_bytes(),
        ),
    )(*args)

    return out_p[:n_nodes, :out_dim]


def init_gcn_params(key, in_dim, out_dim, bias=True):
    """Matches PyTorch _reset_parameters: uniform(-stdv, stdv), stdv=1/sqrt(out_dim)."""
    stdv = 1.0 / (out_dim ** 0.5)
    kw, kb = jax.random.split(key)
    weight = jax.random.uniform(kw, (in_dim, out_dim), jnp.float32, -stdv, stdv)
    b = (jax.random.uniform(kb, (out_dim,), jnp.float32, -stdv, stdv)
         if bias else None)
    return weight, b


def _reference(x, adj, weight, bias):
    out = adj @ (x @ weight)
    if bias is not None:
        out = out + bias[None, :]
    return out


if __name__ == "__main__":
    key = jax.random.PRNGKey(0)

    # (n_nodes, in_dim, out_dim, use_bias, adj dtype, tile overrides).
    # Case 1 is the module's toy shape; case 3 exercises the padding/slice
    # path (non-tile-multiple dims); case 4 forces a multi-tile grid
    # (parallel row axis + K accumulator + last-k bias epilogue) and a
    # pre-cast bf16 adjacency (the multi-layer reuse path).
    cases = [
        (8,   32,  32,  True,  jnp.float32,  dict()),
        (16,   8,  48,  False, jnp.float32,  dict()),
        (200, 40,  72,  True,  jnp.float32,  dict()),
        (256, 192, 128, True,  jnp.bfloat16, dict(tm_max=64, tk_max=128)),
    ]

    for idx, (n, din, dout, use_bias, adj_dtype, tiles) in enumerate(cases):
        kx, ka, kparams, key = jax.random.split(key, 4)

        x = jax.random.normal(kx, (n, din), jnp.float32)
        # Deterministic symmetric, row-normalized dense adjacency.
        a = (jax.random.uniform(ka, (n, n)) > 0.5).astype(jnp.float32)
        adj = a + a.T + jnp.eye(n, dtype=jnp.float32)
        adj = adj / jnp.sum(adj, axis=1, keepdims=True)
        adj = adj.astype(adj_dtype)

        weight, bias = init_gcn_params(kparams, din, dout, bias=use_bias)

        out = gcn_layer(x, adj, weight, bias, **tiles)
        out = jax.block_until_ready(out)

        ref = _reference(x, adj.astype(jnp.float32), weight, bias)
        assert out.shape == ref.shape, (out.shape, ref.shape)
        max_err = float(jnp.max(jnp.abs(out - ref)))
        # Tolerance sized for bf16 MXU operands with f32 accumulation.
        assert jnp.allclose(out, ref, atol=5e-2, rtol=5e-2), (
            f"case {idx}: mismatch vs reference (max abs err {max_err})")

    print("KERNEL_OK")
</pallas_src>

<mosaic_0001>
module attributes {stable_mosaic.version = 11 : i64} {
  func.func @_gcn_fused_kernel(%arg0: i32, %arg1: i32, %arg2: i32, %arg3: memref<8x128xf32, #tpu.memory_space<vmem>>, %arg4: memref<128x128xf32, #tpu.memory_space<vmem>>, %arg5: memref<128x128xbf16, #tpu.memory_space<vmem>>, %arg6: memref<1x128xf32, #tpu.memory_space<vmem>>, %arg7: memref<8x128xf32, #tpu.memory_space<vmem>>, %arg8: memref<8x128xf32, #tpu.memory_space<vmem>>) attributes {dimension_semantics = [#tpu.dimension_semantics<parallel>, #tpu.dimension_semantics<parallel>, #tpu.dimension_semantics<arbitrary>], iteration_bounds = array<i64: 1, 1, 1>, scalar_prefetch = 0 : i64, scratch_operands = 1 : i64, tpu.core_type = #tpu.core_type<tc>, window_params = [{transform_indices = @transform_0, window_bounds = array<i64: 8, 128>}, {transform_indices = @transform_1, window_bounds = array<i64: 128, 128>}, {transform_indices = @transform_2, window_bounds = array<i64: 128, 128>}, {transform_indices = @transform_3, window_bounds = array<i64: 1, 128>}, {transform_indices = @transform_4, window_bounds = array<i64: 8, 128>}]} {
    %c0_i32 = arith.constant 0 : i32
    %0 = arith.cmpi eq, %arg2, %c0_i32 : i32
    %1 = arith.extui %0 : i1 to i32
    %c0_i32_0 = arith.constant 0 : i32
    %2 = arith.cmpi ne, %1, %c0_i32_0 : i32
    scf.if %2 {
      %cst_13 = arith.constant 0.000000e+00 : f32
      %17 = vector.broadcast %cst_13 : f32 to vector<8x128xf32>
      %c0_14 = arith.constant 0 : index
      %c0_15 = arith.constant 0 : index
      %18 = vector.load %arg8[%c0_14, %c0_15] : memref<8x128xf32, #tpu.memory_space<vmem>>, vector<8x128xf32>
      tpu.vector_store %arg8[%c0_14, %c0_15], %17 {strides = array<i32>} : memref<8x128xf32, #tpu.memory_space<vmem>>, vector<8x128xf32>,
    } else {
    }
    %c0 = arith.constant 0 : index
    %c0_1 = arith.constant 0 : index
    %3 = vector.load %arg4[%c0, %c0_1] : memref<128x128xf32, #tpu.memory_space<vmem>>, vector<128x128xf32>
    %4 = arith.truncf %3 : vector<128x128xf32> to vector<128x128xbf16>
    %c0_2 = arith.constant 0 : index
    %c0_3 = arith.constant 0 : index
    %5 = vector.load %arg5[%c0_2, %c0_3] : memref<128x128xbf16, #tpu.memory_space<vmem>>, vector<128x128xbf16>
    %cst = arith.constant dense<0.000000e+00> : vector<128x128xf32>
    %6 = tpu.matmul %4, %5, %cst {dimension_numbers = #tpu.dot_dimension_numbers<[1], [0], [0], [1], [0, 0, 1, 1], [], []>} : vector<128x128xbf16>, vector<128x128xbf16>, vector<128x128xf32> -> vector<128x128xf32>
    %c0_4 = arith.constant 0 : index
    %c0_5 = arith.constant 0 : index
    %7 = vector.load %arg8[%c0_4, %c0_5] : memref<8x128xf32, #tpu.memory_space<vmem>>, vector<8x128xf32>
    %c0_6 = arith.constant 0 : index
    %c0_7 = arith.constant 0 : index
    %8 = vector.load %arg3[%c0_6, %c0_7] : memref<8x128xf32, #tpu.memory_space<vmem>>, vector<8x128xf32>
    %9 = arith.truncf %8 : vector<8x128xf32> to vector<8x128xbf16>
    %10 = arith.truncf %6 : vector<128x128xf32> to vector<128x128xbf16>
    %cst_8 = arith.constant dense<0.000000e+00> : vector<8x128xf32>
    %11 = tpu.matmul %9, %10, %cst_8 {dimension_numbers = #tpu.dot_dimension_numbers<[1], [0], [0], [1], [0, 0, 1, 1], [], []>} : vector<8x128xbf16>, vector<128x128xbf16>, vector<8x128xf32> -> vector<8x128xf32>
    %12 = arith.addf %7, %11 : vector<8x128xf32>
    %c0_9 = arith.constant 0 : index
    %c0_10 = arith.constant 0 : index
    %13 = vector.load %arg8[%c0_9, %c0_10] : memref<8x128xf32, #tpu.memory_space<vmem>>, vector<8x128xf32>
    tpu.vector_store %arg8[%c0_9, %c0_10], %12 {strides = array<i32>} : memref<8x128xf32, #tpu.memory_space<vmem>>, vector<8x128xf32>,
    %c0_i32_11 = arith.constant 0 : i32
    %14 = arith.cmpi eq, %arg2, %c0_i32_11 : i32
    %15 = arith.extui %14 : i1 to i32
    %c0_i32_12 = arith.constant 0 : i32
    %16 = arith.cmpi ne, %15, %c0_i32_12 : i32
    scf.if %16 {
      %c0_13 = arith.constant 0 : index
      %c0_14 = arith.constant 0 : index
      %17 = vector.load %arg8[%c0_13, %c0_14] : memref<8x128xf32, #tpu.memory_space<vmem>>, vector<8x128xf32>
      %c0_15 = arith.constant 0 : index
      %c0_16 = arith.constant 0 : index
      %18 = vector.load %arg6[%c0_15, %c0_16] : memref<1x128xf32, #tpu.memory_space<vmem>>, vector<1x128xf32>
      %19 = vector.broadcast %18 : vector<1x128xf32> to vector<8x128xf32>
      %20 = arith.addf %17, %19 : vector<8x128xf32>
      %c0_17 = arith.constant 0 : index
      %c0_18 = arith.constant 0 : index
      %21 = vector.load %arg7[%c0_17, %c0_18] : memref<8x128xf32, #tpu.memory_space<vmem>>, vector<8x128xf32>
      tpu.vector_store %arg7[%c0_17, %c0_18], %20 {strides = array<i32>} : memref<8x128xf32, #tpu.memory_space<vmem>>, vector<8x128xf32>,
    } else {
    }
    return
  }
  func.func @transform_0(%arg0: i32, %arg1: i32, %arg2: i32) -> (i32, i32) {
    %c0_i32 = arith.constant 0 : i32
    return %arg0, %arg2 : i32, i32
  }
  func.func @transform_1(%arg0: i32, %arg1: i32, %arg2: i32) -> (i32, i32) {
    %c0_i32 = arith.constant 0 : i32
    %c0_i32_0 = arith.constant 0 : i32
    return %arg2, %c0_i32 : i32, i32
  }
  func.func @transform_2(%arg0: i32, %arg1: i32, %arg2: i32) -> (i32, i32) {
    %c0_i32 = arith.constant 0 : i32
    %c0_i32_0 = arith.constant 0 : i32
    return %c0_i32, %arg1 : i32, i32
  }
  func.func @transform_3(%arg0: i32, %arg1: i32, %arg2: i32) -> (i32, i32) {
    %c0_i32 = arith.constant 0 : i32
    %c0_i32_0 = arith.constant 0 : i32
    return %c0_i32, %arg1 : i32, i32
  }
  func.func @transform_4(%arg0: i32, %arg1: i32, %arg2: i32) -> (i32, i32) {
    %c0_i32 = arith.constant 0 : i32
    return %arg0, %arg1 : i32, i32
  }
}

</mosaic_0001>

<llo_original>
// kernel: tpu_custom_call.1
$region0: #{tpu_custom_call.1}
  #allocation0 [shape = 'u32[]', space=smem, size = 0x4, offset = 0x4, fixed_abs, tag = 'smem constant byte address 0x4 - core index']
  #allocation1 [shape = 'u32[144,128]{1,0:T(1,128)}', space=vmem, size = 0x12000, scoped, tag = 'internal scratch']
  #allocation2 [shape = 'f32[8,128]{1,0:T(8,128)}', space=vmem, size = 0x1000, scoped, tag = 'scratch operand']
  %s0 = inlined_call_operand.hbm [shape: f32[8,128], index: 0, kind: input, shape index: {}]
  %s1 = inlined_call_operand.hbm [shape: f32[128,128], index: 1, kind: input, shape index: {}]
  %s2 = inlined_call_operand.hbm [shape: bf16[128,128], index: 2, kind: input, shape index: {}]
  %s3 = inlined_call_operand.vmem [shape: f32[1,128], index: 3, kind: input, shape index: {}]
  %s4 = inlined_call_operand.hbm [shape: f32[8,128], index: 4, kind: output, shape index: {}]
  %s5 = sld [smem:[#allocation0]]
  $region46: #{tpu_custom_call.1} parent=0
    _
  %s7 = ssub.s32 1, %s5
  %s8 = scalar_select 0, %s7, %s5
  $region1: #{tpu_custom_call.1} parent=0
    #allocation3 [shape = 'u8[4096]{0}', space=vmem, size = 0x1000, scoped, tag = 'input window, operand 0, single buffered']
    #allocation4 [shape = 's32[1]{0}', space=sflag, size = 0x4, scoped, tag = 'scoped memory for tpu_custom_call.1']
    #allocation5 [shape = 's32[1]{0}', space=sflag, size = 0x4, scoped, tag = 'scoped memory for tpu_custom_call.1']
    #allocation6 [shape = 'u8[65536]{0}', space=vmem, size = 0x10000, scoped, tag = 'input window, operand 1, single buffered']
    #allocation7 [shape = 's32[1]{0}', space=sflag, size = 0x4, scoped, tag = 'scoped memory for tpu_custom_call.1']
    #allocation8 [shape = 'u8[32768]{0}', space=vmem, size = 0x8000, scoped, tag = 'input window, operand 2, single buffered']
    #allocation9 [shape = 'u8[4096]{0}', space=vmem, size = 0x1000, scoped, tag = 'output window, operand 0, single buffered']
    %9 = vsyncpa [#allocation4], 0
    %10 = vsyncpa [#allocation7], 0
    %11 = vsyncpa [#allocation5], 0
    // Predicated region
    $region2: #{tpu_custom_call.1} parent=1 // pred_check
      _
    $region3: #{tpu_custom_call.1} parent=1 // pred_check_branch
      %13 = sbr.rel (0) target = $region5
    $region4: #{tpu_custom_call.1} parent=1 // pred_region
      %s15 = ssub.s32 128, 128
      %16 = vsyncadd [#allocation4], %s15
      %s18 = sshll.u32 [#allocation3], 4
      %s19 = int_to_ptr.vmem [resolvable:$true] %s18
      %21 = dma.hbm_to_vmem [thread:$0]  %s0, 128, %s19, [#allocation4]
    $region5: #{tpu_custom_call.1} parent=1 // pred_fallthru
      _
    // Predicated region
    $region6: #{tpu_custom_call.1} parent=1 // pred_check
      _
    $region7: #{tpu_custom_call.1} parent=1 // pred_check_branch
      %23 = sbr.rel (0) target = $region9
    $region8: #{tpu_custom_call.1} parent=1 // pred_region
      %s25 = ssub.s32 2048, 2048
      %26 = vsyncadd [#allocation7], %s25
      %s27 = sshll.u32 [#allocation6], 4
      %s28 = int_to_ptr.vmem [resolvable:$true] %s27
      %33 = dma.hbm_to_vmem [thread:$0]  %s1, 2048, %s28, [#allocation7], 128, 128, 8
    $region9: #{tpu_custom_call.1} parent=1 // pred_fallthru
      _
    // Predicated region
    $region10: #{tpu_custom_call.1} parent=1 // pred_check
      _
    $region11: #{tpu_custom_call.1} parent=1 // pred_check_branch
      %35 = sbr.rel (0) target = $region13
    $region12: #{tpu_custom_call.1} parent=1 // pred_region
      %s37 = ssub.s32 1024, 1024
      %38 = vsyncadd [#allocation7], %s37
      %s39 = sshll.u32 [#allocation8], 4
      %s40 = int_to_ptr.vmem [resolvable:$true] %s39
      %45 = dma.hbm_to_vmem [thread:$0]  %s2, 1024, %s40, [#allocation7], 64, 64, 4
    $region13: #{tpu_custom_call.1} parent=1 // pred_fallthru
      _
    // Predicated region
    $region14: #{tpu_custom_call.1} parent=1 // pred_check
      _
    $region15: #{tpu_custom_call.1} parent=1 // pred_check_branch
      %47 = sbr.rel (0) target = $region17
    $region16: #{tpu_custom_call.1} parent=1 // pred_region
      _
    $region17: #{tpu_custom_call.1} parent=1 // pred_fallthru
      _
    // Predicated region
    $region18: #{tpu_custom_call.1} parent=1 // pred_check
      _
    $region19: #{tpu_custom_call.1} parent=1 // pred_check_branch
      %49 = sbr.rel (0) target = $region21
    $region20: #{tpu_custom_call.1} parent=1 // pred_region
      %50 = dma.done [#allocation4], 128
    $region21: #{tpu_custom_call.1} parent=1 // pred_fallthru
      _
    // Predicated region
    $region22: #{tpu_custom_call.1} parent=1 // pred_check
      _
    $region23: #{tpu_custom_call.1} parent=1 // pred_check_branch
      %52 = sbr.rel (0) target = $region25
    $region24: #{tpu_custom_call.1} parent=1 // pred_region
      %53 = dma.done [#allocation7], 2048
    $region25: #{tpu_custom_call.1} parent=1 // pred_fallthru
      _
    // Predicated region
    $region26: #{tpu_custom_call.1} parent=1 // pred_check
      _
    $region27: #{tpu_custom_call.1} parent=1 // pred_check_branch
      %55 = sbr.rel (0) target = $region29
    $region28: #{tpu_custom_call.1} parent=1 // pred_region
      %56 = dma.done [#allocation7], 1024
    $region29: #{tpu_custom_call.1} parent=1 // pred_fallthru
      _
    %p58 = scmp.eq.s32.totalorder 0, 0
    // Predicated region
    $region30: #{tpu_custom_call.1} parent=1 // pred_check
      %p59 = pneg %p58
    $region31: #{tpu_custom_call.1} parent=1 // pred_check_branch
      %61 = sbr.rel (%p59) target = $region33
    $region32: #{tpu_custom_call.1} parent=1 // pred_region
      %62 = vst [vmem:[#allocation2] sm:$0xff] 0.0
    $region33: #{tpu_custom_call.1} parent=1 // pred_fallthru
      _
    %v63 = vld [vmem:[#allocation6] sm:$0xff]
    %v64 = vld [vmem:[#allocation6 + $0x8] sm:$0xff]
    %v65 = vld [vmem:[#allocation6 + $0x10] sm:$0xff]
    %v66 = vld [vmem:[#allocation6 + $0x18] sm:$0xff]
    %v67 = vld [vmem:[#allocation6 + $0x20] sm:$0xff]
    %v68 = vld [vmem:[#allocation6 + $0x28] sm:$0xff]
    %v69 = vld [vmem:[#allocation6 + $0x30] sm:$0xff]
    %v70 = vld [vmem:[#allocation6 + $0x38] sm:$0xff]
    %v71 = vld [vmem:[#allocation6 + $0x40] sm:$0xff]
    %v72 = vld [vmem:[#allocation6 + $0x48] sm:$0xff]
    %v73 = vld [vmem:[#allocation6 + $0x50] sm:$0xff]
    %v74 = vld [vmem:[#allocation6 + $0x58] sm:$0xff]
    %v75 = vld [vmem:[#allocation6 + $0x60] sm:$0xff]
    %v76 = vld [vmem:[#allocation6 + $0x68] sm:$0xff]
    %v77 = vld [vmem:[#allocation6 + $0x70] sm:$0xff]
    %v78 = vld [vmem:[#allocation6 + $0x78] sm:$0xff]
    %v79 = vpack.c.bf16 %v64, %v63
    %v80 = vpack.c.bf16 %v66, %v65
    %v81 = vpack.c.bf16 %v68, %v67
    %v82 = vpack.c.bf16 %v70, %v69
    %v83 = vpack.c.bf16 %v72, %v71
    %v84 = vpack.c.bf16 %v74, %v73
    %v85 = vpack.c.bf16 %v76, %v75
    %v86 = vpack.c.bf16 %v78, %v77
    %v87 = vld [vmem:[#allocation8] sm:$0xf]
    %v88 = vld [vmem:[#allocation8 + $0x4] sm:$0xf]
    %v89 = vld [vmem:[#allocation8 + $0x8] sm:$0xf]
    %v90 = vld [vmem:[#allocation8 + $0xc] sm:$0xf]
    %v91 = vld [vmem:[#allocation8 + $0x10] sm:$0xf]
    %v92 = vld [vmem:[#allocation8 + $0x14] sm:$0xf]
    %v93 = vld [vmem:[#allocation8 + $0x18] sm:$0xf]
    %v94 = vld [vmem:[#allocation8 + $0x1c] sm:$0xf]
    %v95 = vld [vmem:[#allocation8 + $0x20] sm:$0xf]
    %v96 = vld [vmem:[#allocation8 + $0x24] sm:$0xf]
    %v97 = vld [vmem:[#allocation8 + $0x28] sm:$0xf]
    %v98 = vld [vmem:[#allocation8 + $0x2c] sm:$0xf]
    %v99 = vld [vmem:[#allocation8 + $0x30] sm:$0xf]
    %v100 = vld [vmem:[#allocation8 + $0x34] sm:$0xf]
    %v101 = vld [vmem:[#allocation8 + $0x38] sm:$0xf]
    %v102 = vld [vmem:[#allocation8 + $0x3c] sm:$0xf]
    %v119 = vunpack.c.l.b16 %v87
    %v120 = vunpack.c.l.b16 %v88
    %v121 = vunpack.c.l.b16 %v89
    %v122 = vunpack.c.l.b16 %v90
    %v123 = vunpack.c.l.b16 %v91
    %v124 = vunpack.c.l.b16 %v92
    %v125 = vunpack.c.l.b16 %v93
    %v126 = vunpack.c.l.b16 %v94
    %v127 = vunpack.c.l.b16 %v95
    %v128 = vunpack.c.l.b16 %v96
    %v129 = vunpack.c.l.b16 %v97
    %v130 = vunpack.c.l.b16 %v98
    %v131 = vunpack.c.l.b16 %v99
    %v132 = vunpack.c.l.b16 %v100
    %v133 = vunpack.c.l.b16 %v101
    %v134 = vunpack.c.l.b16 %v102
    %v135 = vpack.c.b16 %v120, %v119
    %v136 = vpack.c.b16 %v122, %v121
    %v137 = vpack.c.b16 %v124, %v123
    %v138 = vpack.c.b16 %v126, %v125
    %v139 = vpack.c.b16 %v128, %v127
    %v140 = vpack.c.b16 %v130, %v129
    %v141 = vpack.c.b16 %v132, %v131
    %v142 = vpack.c.b16 %v134, %v133
    %151 = vmatprep.subr.bf16.mxu0 0
    %152 = vmatpush1.bf16.msra.mxu0 %v135
    %153 = vmatprep.subr.bf16.mxu0 0
    %154 = vmatpush1.bf16.msra.mxu0 %v136
    %155 = vmatprep.subr.bf16.mxu0 0
    %156 = vmatpush1.bf16.msra.mxu0 %v137
    %157 = vmatprep.subr.bf16.mxu0 0
    %158 = vmatpush1.bf16.msra.mxu0 %v138
    %159 = vmatprep.subr.bf16.mxu0 0
    %160 = vmatpush1.bf16.msra.mxu0 %v139
    %161 = vmatprep.subr.bf16.mxu0 0
    %162 = vmatpush1.bf16.msra.mxu0 %v140
    %163 = vmatprep.subr.bf16.mxu0 0
    %164 = vmatpush1.bf16.msra.mxu0 %v141
    %165 = vmatprep.subr.bf16.mxu0 0
    %166 = vmatpush1.bf16.msra.mxu0 %v142
    %167 = vmatprep.subr.bf16.mxu0 0
    %168 = vmatpush1.bf16.msra.mxu0 0
    %169 = vmatprep.subr.bf16.mxu0 0
    %170 = vmatpush1.bf16.msra.mxu0 0
    %171 = vmatprep.subr.bf16.mxu0 0
    %172 = vmatpush1.bf16.msra.mxu0 0
    %173 = vmatprep.subr.bf16.mxu0 0
    %174 = vmatpush1.bf16.msra.mxu0 0
    %175 = vmatprep.subr.bf16.mxu0 0
    %176 = vmatpush1.bf16.msra.mxu0 0
    %177 = vmatprep.subr.bf16.mxu0 0
    %178 = vmatpush1.bf16.msra.mxu0 0
    %179 = vmatprep.subr.bf16.mxu0 0
    %180 = vmatpush1.bf16.msra.mxu0 0
    %181 = vmatprep.subr.bf16.mxu0 0
    %182 = vmatpush1.bf16.msra.mxu0 0
    %183 = vmatprep.mubr.bf16.mxu0 0
    %184 = vmatmul.mubr.bf16.gmra.mrb[0].mxu0 %v79
    %v185 = vpop.f32.mrb[0].mxu0
    %v186 = vadd.f32 0.0, %v185
    %v187 = vpop.f32.mrb[0].mxu0
    %v188 = vpop.f32.mrb[0].mxu0
    %v189 = vadd.f32 0.0, %v188
    %v190 = vpop.f32.mrb[0].mxu0
    %191 = vmatprep.mubr.bf16.mxu0 0
    %192 = vmatmul.mubr.bf16.gmra.mrb[0].mxu0 %v80
    %v193 = vpop.f32.mrb[0].mxu0
    %v194 = vadd.f32 0.0, %v193
    %v195 = vpop.f32.mrb[0].mxu0
    %v196 = vpop.f32.mrb[0].mxu0
    %v197 = vadd.f32 0.0, %v196
    %v198 = vpop.f32.mrb[0].mxu0
    %199 = vmatprep.mubr.bf16.mxu0 0
    %200 = vmatmul.mubr.bf16.gmra.mrb[0].mxu0 %v81
    %v201 = vpop.f32.mrb[0].mxu0
    %v202 = vadd.f32 0.0, %v201
    %v203 = vpop.f32.mrb[0].mxu0
    %v204 = vpop.f32.mrb[0].mxu0
    %v205 = vadd.f32 0.0, %v204
    %v206 = vpop.f32.mrb[0].mxu0
    %207 = vmatprep.mubr.bf16.mxu0 0
    %208 = vmatmul.mubr.bf16.gmra.mrb[0].mxu0 %v82
    %v209 = vpop.f32.mrb[0].mxu0
    %v210 = vadd.f32 0.0, %v209
    %v211 = vpop.f32.mrb[0].mxu0
    %v212 = vpop.f32.mrb[0].mxu0
    %v213 = vadd.f32 0.0, %v212
    %v214 = vpop.f32.mrb[0].mxu0
    %215 = vmatprep.mubr.bf16.mxu0 0
    %216 = vmatmul.mubr.bf16.gmra.mrb[0].mxu0 %v83
    %v217 = vpop.f32.mrb[0].mxu0
    %v218 = vadd.f32 0.0, %v217
    %v219 = vpop.f32.mrb[0].mxu0
    %v220 = vpop.f32.mrb[0].mxu0
    %v221 = vadd.f32 0.0, %v220
    %v222 = vpop.f32.mrb[0].mxu0
    %223 = vmatprep.mubr.bf16.mxu0 0
    %224 = vmatmul.mubr.bf16.gmra.mrb[0].mxu0 %v84
    %v225 = vpop.f32.mrb[0].mxu0
    %v226 = vadd.f32 0.0, %v225
    %v227 = vpop.f32.mrb[0].mxu0
    %v228 = vpop.f32.mrb[0].mxu0
    %v229 = vadd.f32 0.0, %v228
    %v230 = vpop.f32.mrb[0].mxu0
    %231 = vmatprep.mubr.bf16.mxu0 0
    %232 = vmatmul.mubr.bf16.gmra.mrb[0].mxu0 %v85
    %v233 = vpop.f32.mrb[0].mxu0
    %v234 = vadd.f32 0.0, %v233
    %v235 = vpop.f32.mrb[0].mxu0
    %v236 = vpop.f32.mrb[0].mxu0
    %v237 = vadd.f32 0.0, %v236
    %v238 = vpop.f32.mrb[0].mxu0
    %239 = vmatprep.mubr.bf16.mxu0 0
    %240 = vmatmul.mubr.bf16.gmra.mrb[0].mxu0 %v86
    %v241 = vpop.f32.mrb[0].mxu0
    %v242 = vadd.f32 0.0, %v241
    %v243 = vpop.f32.mrb[0].mxu0
    %v244 = vpop.f32.mrb[0].mxu0
    %v245 = vadd.f32 0.0, %v244
    %v246 = vpop.f32.mrb[0].mxu0
    %247 = vdwg.mxu0
    %v248 = vld [vmem:[#allocation2] sm:$0xff]
    %v249 = vld [vmem:[#allocation3] sm:$0xff]
    %v250 = vpack.c.bf16 %v249, %v249
    %v251 = vpack.c.bf16 %v189, %v186
    %v252 = vpack.c.bf16 %v197, %v194
    %v253 = vpack.c.bf16 %v205, %v202
    %v254 = vpack.c.bf16 %v213, %v210
    %v255 = vpack.c.bf16 %v221, %v218
    %v256 = vpack.c.bf16 %v229, %v226
    %v257 = vpack.c.bf16 %v237, %v234
    %v258 = vpack.c.bf16 %v245, %v242
    %259 = vmatprep.subr.bf16.mxu0 0
    %260 = vmatpush1.bf16.msra.mxu0 %v251
    %261 = vmatprep.subr.bf16.mxu0 0
    %262 = vmatpush1.bf16.msra.mxu0 %v252
    %263 = vmatprep.subr.bf16.mxu0 0
    %264 = vmatpush1.bf16.msra.mxu0 %v253
    %265 = vmatprep.subr.bf16.mxu0 0
    %266 = vmatpush1.bf16.msra.mxu0 %v254
    %267 = vmatprep.subr.bf16.mxu0 0
    %268 = vmatpush1.bf16.msra.mxu0 %v255
    %269 = vmatprep.subr.bf16.mxu0 0
    %270 = vmatpush1.bf16.msra.mxu0 %v256
    %271 = vmatprep.subr.bf16.mxu0 0
    %272 = vmatpush1.bf16.msra.mxu0 %v257
    %273 = vmatprep.subr.bf16.mxu0 0
    %274 = vmatpush1.bf16.msra.mxu0 %v258
    %275 = vmatprep.subr.bf16.mxu0 0
    %276 = vmatpush1.bf16.msra.mxu0 0
    %277 = vmatprep.subr.bf16.mxu0 0
    %278 = vmatpush1.bf16.msra.mxu0 0
    %279 = vmatprep.subr.bf16.mxu0 0
    %280 = vmatpush1.bf16.msra.mxu0 0
    %281 = vmatprep.subr.bf16.mxu0 0
    %282 = vmatpush1.bf16.msra.mxu0 0
    %283 = vmatprep.subr.bf16.mxu0 0
    %284 = vmatpush1.bf16.msra.mxu0 0
    %285 = vmatprep.subr.bf16.mxu0 0
    %286 = vmatpush1.bf16.msra.mxu0 0
    %287 = vmatprep.subr.bf16.mxu0 0
    %288 = vmatpush1.bf16.msra.mxu0 0
    %289 = vmatprep.subr.bf16.mxu0 0
    %290 = vmatpush1.bf16.msra.mxu0 0
    %291 = vmatprep.mubr.bf16.mxu0 0
    %292 = vmatmul.mubr.bf16.gmra.mrb[0].mxu0 %v250
    %v293 = vpop.f32.mrb[0].mxu0
    %v294 = vadd.f32 0.0, %v293
    %v295 = vpop.f32.mrb[0].mxu0
    %v296 = vpop.f32.mrb[0].mxu0
    %v297 = vpop.f32.mrb[0].mxu0
    %298 = vdwg.mxu0
    %v299 = vadd.f32 %v248, %v294
    %300 = vst [vmem:[#allocation2] sm:$0xff] %v299
    // Predicated region
    $region34: #{tpu_custom_call.1} parent=1 // pred_check
      %p301 = pneg %p58
    $region35: #{tpu_custom_call.1} parent=1 // pred_check_branch
      %303 = sbr.rel (%p301) target = $region37
    $region36: #{tpu_custom_call.1} parent=1 // pred_region
      %v304 = vld [vmem:[#allocation2] sm:$0xff]
      %v305 = vld [vmem:[%s3] sm:$0x1]
      %v307 = vlaneseq
      %v308 = vshrl.u32 %v307, 7
      %v309 = vsub.s32 0, %v308
      %v310 = vrot.slane %v305, %v309
      %v312 = vadd.f32 %v304, %v310
      %313 = vst [vmem:[#allocation9] sm:$0xff] %v312
    $region37: #{tpu_custom_call.1} parent=1 // pred_fallthru
      _
    // Predicated region
    $region38: #{tpu_custom_call.1} parent=1 // pred_check
      _
    $region39: #{tpu_custom_call.1} parent=1 // pred_check_branch
      %315 = sbr.rel (0) target = $region41
    $region40: #{tpu_custom_call.1} parent=1 // pred_region
      %s317 = ssub.s32 128, 128
      %318 = vsyncadd [#allocation5], %s317
      %s320 = sshll.u32 [#allocation9], 4
      %s321 = int_to_ptr.vmem [resolvable:$true] %s320
      %323 = dma.vmem_to_hbm [thread:$0]  %s321, 128, %s4, [#allocation5]
    $region41: #{tpu_custom_call.1} parent=1 // pred_fallthru
      _
    // Predicated region
    $region42: #{tpu_custom_call.1} parent=1 // pred_check
      _
    $region43: #{tpu_custom_call.1} parent=1 // pred_check_branch
      %325 = sbr.rel (0) target = $region45
    $region44: #{tpu_custom_call.1} parent=1 // pred_region
      %326 = dma.done [#allocation5], 128
    $region45: #{tpu_custom_call.1} parent=1 // pred_fallthru
      _
    %327 = vsyncpa [#allocation4], 1
    %328 = vsyncpa [#allocation7], 1
    %329 = vsyncpa [#allocation5], 1

</llo_original>
